<compile_context>
chip_gen: v5e
topology: v5e:2x2
jax: 0.10.0
libtpu: 0.0.40
codegen_flags: <defaults>
</compile_context>

<pallas_src>
import jax
import jax.numpy as jnp
from jax import lax
from jax.experimental import pallas as pl
from jax.experimental.pallas import tpu as pltpu


# ---------------------------------------------------------------------------
# in-kernel helpers (f32 elementwise everywhere: v5e has no bf16 VPU/EUP path)
# ---------------------------------------------------------------------------
def _gelu(x):
    # tanh-approximation GELU (EUP friendly on TPU)
    c = jnp.asarray(0.7978845608028654, x.dtype)  # sqrt(2/pi)
    return 0.5 * x * (1.0 + jnp.tanh(c * (x + 0.044715 * x * x * x)))


def _layernorm(x, gamma, beta, eps=1e-5):
    mu = jnp.mean(x, axis=-1, keepdims=True)
    var = jnp.mean((x - mu) ** 2, axis=-1, keepdims=True)
    return (x - mu) * lax.rsqrt(var + eps) * gamma + beta


def _l2_normalize(x):
    # tiny eps only guards the degenerate all-zero row; otherwise matches torch.norm(p=2)
    return x * lax.rsqrt(jnp.sum(x * x, axis=-1, keepdims=True) + 1e-12)


# ---------------------------------------------------------------------------
# Fused forward kernel: edge MLP tail + path MLP + sent_encoder + align loss
# ---------------------------------------------------------------------------
def fused_forward_kernel(
    # edge_encoder (layer-1 pre-activation already gathered in XLA)
    eh1_ref, eg_ref, ebeta_ref, ew2_ref, eb2_ref,
    # path_encoder MLP
    mp_ref, pw1_ref, pb1_ref, pg_ref, pbeta_ref, pw2_ref, pb2_ref,
    # sent_encoder
    lm_ref, sw_ref, sb_ref,
    # selection one-hot matrices (graph token 0, positive / negative lm samples)
    sele_ref, psel_ref, nsel_ref,
    # align_predictor (AlignMutualInfo)
    wl_ref, bl_ref, wg_ref, bg_ref,
    # outputs
    loss_ref, eemb_ref, pemb_ref,
):
    f32 = jnp.float32

    # --- edge_encoder: (Linear folded into eh1) -> LayerNorm -> GELU -> Linear ----
    he = _gelu(_layernorm(eh1_ref[...], eg_ref[...], ebeta_ref[...]))
    e_emb = jnp.dot(he, ew2_ref[...], preferred_element_type=f32) + eb2_ref[...]
    eemb_ref[...] = e_emb

    # --- path_encoder: Linear -> LayerNorm -> GELU -> Linear ----------------------
    hp = jnp.dot(mp_ref[...], pw1_ref[...], preferred_element_type=f32) + pb1_ref[...]
    hp = _gelu(_layernorm(hp, pg_ref[...], pbeta_ref[...]))
    p_emb = jnp.dot(hp, pw2_ref[...], preferred_element_type=f32) + pb2_ref[...]
    pemb_ref[...] = p_emb

    # --- sent_encoder --------------------------------------------------------------
    lm_tok = jnp.dot(lm_ref[...], sw_ref[...], preferred_element_type=f32) + sb_ref[...]

    # --- token / sample selection (one-hot matmuls; no dynamic indexing needed) ----
    g_in = jnp.dot(sele_ref[...], e_emb, preferred_element_type=f32)   # (B, d_model)
    pos = jnp.dot(psel_ref[...], lm_tok, preferred_element_type=f32)   # (B, d_model)
    neg = jnp.dot(nsel_ref[...], lm_tok, preferred_element_type=f32)   # (B, d_model)

    # --- AlignMutualInfo ------------------------------------------------------------
    c = jnp.float32(1.0 / 11008.0)  # N / M from the reference module (N=1.0, M=11008.0)
    l = jnp.dot(g_in, wl_ref[...], preferred_element_type=f32) + bl_ref[...]
    p = jnp.dot(pos, wg_ref[...], preferred_element_type=f32) + bg_ref[...]
    n = jnp.dot(neg, wg_ref[...], preferred_element_type=f32) + bg_ref[...]

    l = _l2_normalize(l)
    p = _l2_normalize(p)
    n = _l2_normalize(n)

    d_pos = jnp.sum(l * p, axis=-1, keepdims=True)   # (B, 1), row-wise cosine logits
    d_neg = jnp.sum(l * n, axis=-1, keepdims=True)

    # log(exp(d)/(exp(d)+c)) = d - log(exp(d)+c);  log(1 - exp(d)/(exp(d)+c)) = log(c) - log(exp(d)+c)
    pos_scores = d_pos - jnp.log(jnp.exp(d_pos) + c)
    neg_scores = jnp.log(c) - jnp.log(jnp.exp(d_neg) + c)

    b = jnp.float32(d_pos.shape[0])
    loss = -(jnp.sum(pos_scores) / b) - (jnp.sum(neg_scores) / b)
    loss_ref[...] = jnp.reshape(loss, (1, 1))


# ---------------------------------------------------------------------------
# pallas_call wrapper (single full-array block per operand; shapes are small)
# ---------------------------------------------------------------------------
def _full_spec(shape):
    return pl.BlockSpec(shape, lambda i, n=len(shape): (0,) * n)


def pallas_fused_forward(
    eh1, eg, ebeta, ew2, eb2,
    mp, pw1, pb1, pg, pbeta, pw2, pb2,
    lm, sw, sb,
    sel_e, pos_sel, neg_sel,
    wl, bl, wg, bg,
):
    E, d = eh1.shape
    P = mp.shape[0]
    args = (eh1, eg, ebeta, ew2, eb2,
            mp, pw1, pb1, pg, pbeta, pw2, pb2,
            lm, sw, sb,
            sel_e, pos_sel, neg_sel,
            wl, bl, wg, bg)
    out_shape = (
        jax.ShapeDtypeStruct((1, 1), jnp.float32),  # align loss
        jax.ShapeDtypeStruct((E, d), jnp.float32),  # edge embeddings (aux)
        jax.ShapeDtypeStruct((P, d), jnp.float32),  # path embeddings (aux)
    )
    loss, e_emb, p_emb = pl.pallas_call(
        fused_forward_kernel,
        out_shape=out_shape,
        grid=(1,),
        in_specs=[_full_spec(a.shape) for a in args],
        out_specs=tuple(_full_spec(s.shape) for s in out_shape),
        compiler_params=pltpu.CompilerParams(dimension_semantics=("parallel",)),
    )(*args)
    return loss[0, 0], e_emb, p_emb


# ---------------------------------------------------------------------------
# Parameter construction (deterministic, nn.Module.__init__ shapes at small scale)
# ---------------------------------------------------------------------------
def init_linear(key, din, dout):
    w = 0.02 * jax.random.normal(key, (din, dout), jnp.float32)
    b = jnp.zeros((1, dout), jnp.float32)
    return w, b


def init_mlp(key, din, dhid, dout):
    k1, k2 = jax.random.split(key)
    w1, b1 = init_linear(k1, din, dhid)
    w2, b2 = init_linear(k2, dhid, dout)
    gamma = jnp.ones((1, dhid), jnp.float32)
    beta = jnp.zeros((1, dhid), jnp.float32)
    return dict(w1=w1, b1=b1, gamma=gamma, beta=beta, w2=w2, b2=b2)


# ---------------------------------------------------------------------------
# FullTransformer.forward (align-loss path)
# ---------------------------------------------------------------------------
def full_transformer_forward(
    params,
    cfg,
    edge_index,              # (2, E) int32, global node indices into B*N
    edge_type,               # (E,)  int32
    node_type_ids,           # (B, N) int32
    token_lens,              # python list, edges per graph (unflattened_edge_type lens)
    lm_all_states,           # (B, L, d_sentence) f32
    metapath_feature,        # list of (P_i, mp_dim) f32
    metapath_feature_count,  # list of (2, P_i) int32
    matched_lines,           # (B, N) int32   (synthetic Matcher output, kg->lm index)
):
    n_etype, n_ntype = cfg["n_etype"], cfg["n_ntype"]
    B, L, d_sentence = lm_all_states.shape

    # --- get_graph_edge_embedding: fold the one-hot @ W1 into weight-row gathers ----
    ep = params["edge_encoder"]
    w1e = ep["w1"]                                          # (n_etype + 2*n_ntype, d_model)
    node_type = node_type_ids.reshape(-1)
    head_type = node_type[edge_index[0]]
    tail_type = node_type[edge_index[1]]
    edge_h1 = (w1e[edge_type]
               + w1e[n_etype + head_type]
               + w1e[n_etype + n_ntype + tail_type]
               + ep["b1"])                                  # (E, d_model) layer-1 pre-activation
    E = edge_h1.shape[0]

    flat_matched = (matched_lines + 1).astype(jnp.int32).reshape(-1)
    matched_edges = jnp.stack(
        [flat_matched[edge_index[0]], flat_matched[edge_index[1]]], axis=-1)   # (E, 2)

    # --- get_graph_path_embedding inputs --------------------------------------------
    flat_mp = jnp.concatenate(metapath_feature, axis=0)                        # (P, mp_dim)
    path_idx = jnp.concatenate(metapath_feature_count, axis=1).astype(jnp.int32)
    matched_path = jnp.stack(                                                  # noqa: F841
        [flat_matched[path_idx[0]], flat_matched[path_idx[1]]], axis=-1)       # unused by loss

    # --- construct_token: only graph token 0 / matched token 0 reach the align loss --
    starts, s = [], 0
    for length in token_lens:
        starts.append(s)
        s += length
    starts_arr = jnp.asarray(starts, jnp.int32)                                # (B,)
    sel_e = jax.nn.one_hot(starts_arr, E, dtype=jnp.float32)                   # (B, E)

    # --- positive / negative lm sampling (fully on device, no host round-trip) ------
    elem = matched_edges[starts_arr]                        # (B, 2) == matched_tokens[:, 0]
    pos_idx = elem[:, 0]                                    # deterministic for random.randint(0,1)
    neg0 = elem[:, 0] + 5
    in_list = jnp.any(neg0[:, None] == elem, axis=1)        # "negative_index in elem_list"
    neg_idx = neg0 + in_list.astype(jnp.int32)
    bidx = jnp.arange(B, dtype=jnp.int32)
    pos_sel = jax.nn.one_hot(bidx * L + pos_idx, B * L, dtype=jnp.float32)     # (B, B*L)
    neg_sel = jax.nn.one_hot(bidx * L + neg_idx, B * L, dtype=jnp.float32)     # (B, B*L)

    # --- fused kernel: edge MLP tail + path MLP + sent_encoder + AlignMutualInfo ----
    pp = params["path_encoder"]
    sw, sb = params["sent_encoder"]
    ap = params["align_predictor"]
    align_loss, _edge_embeddings, _path_embeddings = pallas_fused_forward(
        edge_h1, ep["gamma"], ep["beta"], ep["w2"], ep["b2"],
        flat_mp, pp["w1"], pp["b1"], pp["gamma"], pp["beta"], pp["w2"], pp["b2"],
        lm_all_states.reshape(B * L, d_sentence), sw, sb,
        sel_e, pos_sel, neg_sel,
        ap["lm_w"], ap["lm_b"], ap["gnn_w"], ap["gnn_b"],
    )
    return align_loss


# ---------------------------------------------------------------------------
# Driver
# ---------------------------------------------------------------------------
if __name__ == "__main__":
    key = jax.random.PRNGKey(0)

    # Small synthetic configuration consistent with the module's __init__.
    cfg = dict(n_ntype=4, n_etype=3, d_sentence=48, d_model=32, align_hidden=16, mp_dim=41)
    B, N, L = 2, 8, 16
    token_lens = [5, 7]            # edges per graph (unflattened_edge_type lengths)
    path_lens = [3, 4]
    E, P = sum(token_lens), sum(path_lens)

    keys = jax.random.split(key, 12)
    params = {
        "sent_encoder": init_linear(keys[0], cfg["d_sentence"], cfg["d_model"]),
        "edge_encoder": init_mlp(keys[1], cfg["n_etype"] + 2 * cfg["n_ntype"], cfg["d_model"], cfg["d_model"]),
        "path_encoder": init_mlp(keys[2], cfg["mp_dim"], cfg["d_model"], cfg["d_model"]),
        "align_predictor": dict(
            lm_w=0.02 * jax.random.normal(keys[3], (cfg["d_model"], cfg["align_hidden"]), jnp.float32),
            lm_b=jnp.zeros((1, cfg["align_hidden"]), jnp.float32),
            gnn_w=0.02 * jax.random.normal(keys[4], (cfg["d_model"], cfg["align_hidden"]), jnp.float32),
            gnn_b=jnp.zeros((1, cfg["align_hidden"]), jnp.float32),
        ),
    }

    # Deterministic example inputs. Per-graph node indices live in [g*N, (g+1)*N).
    ei_src = jnp.concatenate(
        [g * N + jax.random.randint(jax.random.fold_in(keys[5], g), (token_lens[g],), 0, N)
         for g in range(B)]
    )
    ei_dst = jnp.concatenate(
        [g * N + jax.random.randint(jax.random.fold_in(keys[6], g), (token_lens[g],), 0, N)
         for g in range(B)]
    )
    edge_index = jnp.stack([ei_src, ei_dst]).astype(jnp.int32)                # (2, E)
    edge_type = jax.random.randint(keys[7], (E,), 0, cfg["n_etype"]).astype(jnp.int32)
    node_type_ids = jax.random.randint(keys[8], (B, N), 0, cfg["n_ntype"]).astype(jnp.int32)
    lm_all_states = jax.random.normal(keys[9], (B, L, cfg["d_sentence"]), jnp.float32)

    metapath_feature = [
        jax.random.normal(jax.random.fold_in(keys[10], g), (path_lens[g], cfg["mp_dim"]), jnp.float32)
        for g in range(B)
    ]
    metapath_feature_count = [
        (g * N + jax.random.randint(jax.random.fold_in(keys[11], g), (2, path_lens[g]), 0, N)).astype(jnp.int32)
        for g in range(B)
    ]
    # Synthetic stand-in for Matcher.match output (kg node -> lm token index); values are
    # small enough that index + 1 + 5 + 1 stays within the lm sequence length L.
    matched_lines = (jax.random.randint(jax.random.fold_in(key, 99), (B, N), 0, 9)).astype(jnp.int32)

    # jit the whole forward: cfg / token_lens are static (closure), arrays are traced.
    def _fwd(params, edge_index, edge_type, node_type_ids, lm_all_states,
             metapath_feature, metapath_feature_count, matched_lines):
        return full_transformer_forward(
            params, cfg, edge_index, edge_type, node_type_ids, token_lens,
            lm_all_states, metapath_feature, metapath_feature_count, matched_lines)

    fwd = jax.jit(_fwd)

    loss = fwd(params, edge_index, edge_type, node_type_ids,
               lm_all_states, metapath_feature, metapath_feature_count, matched_lines)
    loss = jax.block_until_ready(loss)
    assert jnp.isfinite(loss), "align loss is not finite"
    print("KERNEL_OK")
</pallas_src>

<mosaic_0001>
module attributes {stable_mosaic.version = 11 : i64} {
  func.func @fused_forward_kernel(%arg0: i32, %arg1: memref<12x32xf32, #tpu.memory_space<vmem>>, %arg2: memref<1x32xf32, #tpu.memory_space<vmem>>, %arg3: memref<1x32xf32, #tpu.memory_space<vmem>>, %arg4: memref<32x32xf32, #tpu.memory_space<vmem>>, %arg5: memref<1x32xf32, #tpu.memory_space<vmem>>, %arg6: memref<7x41xf32, #tpu.memory_space<vmem>>, %arg7: memref<41x32xf32, #tpu.memory_space<vmem>>, %arg8: memref<1x32xf32, #tpu.memory_space<vmem>>, %arg9: memref<1x32xf32, #tpu.memory_space<vmem>>, %arg10: memref<1x32xf32, #tpu.memory_space<vmem>>, %arg11: memref<32x32xf32, #tpu.memory_space<vmem>>, %arg12: memref<1x32xf32, #tpu.memory_space<vmem>>, %arg13: memref<32x48xf32, #tpu.memory_space<vmem>>, %arg14: memref<48x32xf32, #tpu.memory_space<vmem>>, %arg15: memref<1x32xf32, #tpu.memory_space<vmem>>, %arg16: memref<2x12xf32, #tpu.memory_space<vmem>>, %arg17: memref<2x32xf32, #tpu.memory_space<vmem>>, %arg18: memref<2x32xf32, #tpu.memory_space<vmem>>, %arg19: memref<32x16xf32, #tpu.memory_space<vmem>>, %arg20: memref<1x16xf32, #tpu.memory_space<vmem>>, %arg21: memref<32x16xf32, #tpu.memory_space<vmem>>, %arg22: memref<1x16xf32, #tpu.memory_space<vmem>>, %arg23: memref<1x1xf32, #tpu.memory_space<vmem>>, %arg24: memref<12x32xf32, #tpu.memory_space<vmem>>, %arg25: memref<7x32xf32, #tpu.memory_space<vmem>>) attributes {dimension_semantics = [#tpu.dimension_semantics<parallel>], iteration_bounds = array<i64: 1>, scalar_prefetch = 0 : i64, scratch_operands = 0 : i64, tpu.core_type = #tpu.core_type<tc>, window_params = [{pipeline_mode = #tpu.pipeline_mode<synchronous>, transform_indices = @transform_0, window_bounds = array<i64: 12, 32>}, {pipeline_mode = #tpu.pipeline_mode<synchronous>, transform_indices = @transform_1, window_bounds = array<i64: 1, 32>}, {pipeline_mode = #tpu.pipeline_mode<synchronous>, transform_indices = @transform_2, window_bounds = array<i64: 1, 32>}, {pipeline_mode = #tpu.pipeline_mode<synchronous>, transform_indices = @transform_3, window_bounds = array<i64: 32, 32>}, {pipeline_mode = #tpu.pipeline_mode<synchronous>, transform_indices = @transform_4, window_bounds = array<i64: 1, 32>}, {pipeline_mode = #tpu.pipeline_mode<synchronous>, transform_indices = @transform_5, window_bounds = array<i64: 7, 41>}, {pipeline_mode = #tpu.pipeline_mode<synchronous>, transform_indices = @transform_6, window_bounds = array<i64: 41, 32>}, {pipeline_mode = #tpu.pipeline_mode<synchronous>, transform_indices = @transform_7, window_bounds = array<i64: 1, 32>}, {pipeline_mode = #tpu.pipeline_mode<synchronous>, transform_indices = @transform_8, window_bounds = array<i64: 1, 32>}, {pipeline_mode = #tpu.pipeline_mode<synchronous>, transform_indices = @transform_9, window_bounds = array<i64: 1, 32>}, {pipeline_mode = #tpu.pipeline_mode<synchronous>, transform_indices = @transform_10, window_bounds = array<i64: 32, 32>}, {pipeline_mode = #tpu.pipeline_mode<synchronous>, transform_indices = @transform_11, window_bounds = array<i64: 1, 32>}, {pipeline_mode = #tpu.pipeline_mode<synchronous>, transform_indices = @transform_12, window_bounds = array<i64: 32, 48>}, {pipeline_mode = #tpu.pipeline_mode<synchronous>, transform_indices = @transform_13, window_bounds = array<i64: 48, 32>}, {pipeline_mode = #tpu.pipeline_mode<synchronous>, transform_indices = @transform_14, window_bounds = array<i64: 1, 32>}, {pipeline_mode = #tpu.pipeline_mode<synchronous>, transform_indices = @transform_15, window_bounds = array<i64: 2, 12>}, {pipeline_mode = #tpu.pipeline_mode<synchronous>, transform_indices = @transform_16, window_bounds = array<i64: 2, 32>}, {pipeline_mode = #tpu.pipeline_mode<synchronous>, transform_indices = @transform_17, window_bounds = array<i64: 2, 32>}, {pipeline_mode = #tpu.pipeline_mode<synchronous>, transform_indices = @transform_18, window_bounds = array<i64: 32, 16>}, {pipeline_mode = #tpu.pipeline_mode<synchronous>, transform_indices = @transform_19, window_bounds = array<i64: 1, 16>}, {pipeline_mode = #tpu.pipeline_mode<synchronous>, transform_indices = @transform_20, window_bounds = array<i64: 32, 16>}, {pipeline_mode = #tpu.pipeline_mode<synchronous>, transform_indices = @transform_21, window_bounds = array<i64: 1, 16>}, {pipeline_mode = #tpu.pipeline_mode<synchronous>, transform_indices = @transform_22, window_bounds = array<i64: 1, 1>}, {pipeline_mode = #tpu.pipeline_mode<synchronous>, transform_indices = @transform_23, window_bounds = array<i64: 12, 32>}, {pipeline_mode = #tpu.pipeline_mode<synchronous>, transform_indices = @transform_24, window_bounds = array<i64: 7, 32>}]} {
    %c0 = arith.constant 0 : index
    %c0_0 = arith.constant 0 : index
    %0 = vector.load %arg1[%c0, %c0_0] : memref<12x32xf32, #tpu.memory_space<vmem>>, vector<12x32xf32>
    %c0_1 = arith.constant 0 : index
    %c0_2 = arith.constant 0 : index
    %1 = vector.load %arg2[%c0_1, %c0_2] : memref<1x32xf32, #tpu.memory_space<vmem>>, vector<1x32xf32>
    %c0_3 = arith.constant 0 : index
    %c0_4 = arith.constant 0 : index
    %2 = vector.load %arg3[%c0_3, %c0_4] : memref<1x32xf32, #tpu.memory_space<vmem>>, vector<1x32xf32>
    %cst = arith.constant dense<0.000000e+00> : vector<12xf32>
    %3 = vector.multi_reduction <add>, %0, %cst [1] : vector<12x32xf32> to vector<12xf32>
    %4 = vector.shape_cast %3 : vector<12xf32> to vector<12x1xf32>
    %cst_5 = arith.constant 3.200000e+01 : f32
    %5 = vector.broadcast %cst_5 : f32 to vector<12x1xf32>
    %6 = arith.divf %4, %5 : vector<12x1xf32>
    %7 = vector.broadcast %6 : vector<12x1xf32> to vector<12x32xf32>
    %8 = arith.subf %0, %7 : vector<12x32xf32>
    %9 = arith.mulf %8, %8 : vector<12x32xf32>
    %cst_6 = arith.constant dense<0.000000e+00> : vector<12xf32>
    %10 = vector.multi_reduction <add>, %9, %cst_6 [1] : vector<12x32xf32> to vector<12xf32>
    %11 = vector.shape_cast %10 : vector<12xf32> to vector<12x1xf32>
    %cst_7 = arith.constant 3.200000e+01 : f32
    %12 = vector.broadcast %cst_7 : f32 to vector<12x1xf32>
    %13 = arith.divf %11, %12 : vector<12x1xf32>
    %14 = vector.broadcast %6 : vector<12x1xf32> to vector<12x32xf32>
    %15 = arith.subf %0, %14 : vector<12x32xf32>
    %cst_8 = arith.constant 9.99999974E-6 : f32
    %16 = vector.broadcast %cst_8 : f32 to vector<12x1xf32>
    %17 = arith.addf %13, %16 : vector<12x1xf32>
    %18 = math.rsqrt %17 : vector<12x1xf32>
    %19 = vector.broadcast %18 : vector<12x1xf32> to vector<12x32xf32>
    %20 = arith.mulf %15, %19 : vector<12x32xf32>
    %21 = vector.broadcast %1 : vector<1x32xf32> to vector<12x32xf32>
    %22 = arith.mulf %20, %21 : vector<12x32xf32>
    %23 = vector.broadcast %2 : vector<1x32xf32> to vector<12x32xf32>
    %24 = arith.addf %22, %23 : vector<12x32xf32>
    %cst_9 = arith.constant 5.000000e-01 : f32
    %25 = vector.broadcast %cst_9 : f32 to vector<12x32xf32>
    %26 = arith.mulf %25, %24 : vector<12x32xf32>
    %cst_10 = arith.constant 4.471500e-02 : f32
    %27 = vector.broadcast %cst_10 : f32 to vector<12x32xf32>
    %28 = arith.mulf %27, %24 : vector<12x32xf32>
    %29 = arith.mulf %28, %24 : vector<12x32xf32>
    %30 = arith.mulf %29, %24 : vector<12x32xf32>
    %31 = arith.addf %24, %30 : vector<12x32xf32>
    %cst_11 = arith.constant 0.797884583 : f32
    %32 = vector.broadcast %cst_11 : f32 to vector<12x32xf32>
    %33 = arith.mulf %32, %31 : vector<12x32xf32>
    %34 = math.tanh %33 : vector<12x32xf32>
    %cst_12 = arith.constant 1.000000e+00 : f32
    %35 = vector.broadcast %cst_12 : f32 to vector<12x32xf32>
    %36 = arith.addf %35, %34 : vector<12x32xf32>
    %37 = arith.mulf %26, %36 : vector<12x32xf32>
    %c0_13 = arith.constant 0 : index
    %c0_14 = arith.constant 0 : index
    %38 = vector.load %arg4[%c0_13, %c0_14] : memref<32x32xf32, #tpu.memory_space<vmem>>, vector<32x32xf32>
    %cst_15 = arith.constant dense<0.000000e+00> : vector<12x32xf32>
    %39 = tpu.matmul %37, %38, %cst_15 {dimension_numbers = #tpu.dot_dimension_numbers<[1], [0], [0], [1], [0, 0, 1, 1], [], []>} : vector<12x32xf32>, vector<32x32xf32>, vector<12x32xf32> -> vector<12x32xf32>
    %c0_16 = arith.constant 0 : index
    %c0_17 = arith.constant 0 : index
    %40 = vector.load %arg5[%c0_16, %c0_17] : memref<1x32xf32, #tpu.memory_space<vmem>>, vector<1x32xf32>
    %41 = vector.broadcast %40 : vector<1x32xf32> to vector<12x32xf32>
    %42 = arith.addf %39, %41 : vector<12x32xf32>
    %c0_18 = arith.constant 0 : index
    %c0_19 = arith.constant 0 : index
    %43 = vector.load %arg24[%c0_18, %c0_19] : memref<12x32xf32, #tpu.memory_space<vmem>>, vector<12x32xf32>
    tpu.vector_store %arg24[%c0_18, %c0_19], %42 {strides = array<i32>} : memref<12x32xf32, #tpu.memory_space<vmem>>, vector<12x32xf32>,
    %c0_20 = arith.constant 0 : index
    %c0_21 = arith.constant 0 : index
    %44 = vector.load %arg6[%c0_20, %c0_21] : memref<7x41xf32, #tpu.memory_space<vmem>>, vector<7x41xf32>
    %c0_22 = arith.constant 0 : index
    %c0_23 = arith.constant 0 : index
    %45 = vector.load %arg7[%c0_22, %c0_23] : memref<41x32xf32, #tpu.memory_space<vmem>>, vector<41x32xf32>
    %cst_24 = arith.constant dense<0.000000e+00> : vector<7x32xf32>
    %46 = tpu.matmul %44, %45, %cst_24 {dimension_numbers = #tpu.dot_dimension_numbers<[1], [0], [0], [1], [0, 0, 1, 1], [], []>} : vector<7x41xf32>, vector<41x32xf32>, vector<7x32xf32> -> vector<7x32xf32>
    %c0_25 = arith.constant 0 : index
    %c0_26 = arith.constant 0 : index
    %47 = vector.load %arg8[%c0_25, %c0_26] : memref<1x32xf32, #tpu.memory_space<vmem>>, vector<1x32xf32>
    %48 = vector.broadcast %47 : vector<1x32xf32> to vector<7x32xf32>
    %49 = arith.addf %46, %48 : vector<7x32xf32>
    %c0_27 = arith.constant 0 : index
    %c0_28 = arith.constant 0 : index
    %50 = vector.load %arg9[%c0_27, %c0_28] : memref<1x32xf32, #tpu.memory_space<vmem>>, vector<1x32xf32>
    %c0_29 = arith.constant 0 : index
    %c0_30 = arith.constant 0 : index
    %51 = vector.load %arg10[%c0_29, %c0_30] : memref<1x32xf32, #tpu.memory_space<vmem>>, vector<1x32xf32>
    %cst_31 = arith.constant dense<0.000000e+00> : vector<7xf32>
    %52 = vector.multi_reduction <add>, %49, %cst_31 [1] : vector<7x32xf32> to vector<7xf32>
    %53 = vector.shape_cast %52 : vector<7xf32> to vector<7x1xf32>
    %cst_32 = arith.constant 3.200000e+01 : f32
    %54 = vector.broadcast %cst_32 : f32 to vector<7x1xf32>
    %55 = arith.divf %53, %54 : vector<7x1xf32>
    %56 = vector.broadcast %55 : vector<7x1xf32> to vector<7x32xf32>
    %57 = arith.subf %49, %56 : vector<7x32xf32>
    %58 = arith.mulf %57, %57 : vector<7x32xf32>
    %cst_33 = arith.constant dense<0.000000e+00> : vector<7xf32>
    %59 = vector.multi_reduction <add>, %58, %cst_33 [1] : vector<7x32xf32> to vector<7xf32>
    %60 = vector.shape_cast %59 : vector<7xf32> to vector<7x1xf32>
    %cst_34 = arith.constant 3.200000e+01 : f32
    %61 = vector.broadcast %cst_34 : f32 to vector<7x1xf32>
    %62 = arith.divf %60, %61 : vector<7x1xf32>
    %63 = vector.broadcast %55 : vector<7x1xf32> to vector<7x32xf32>
    %64 = arith.subf %49, %63 : vector<7x32xf32>
    %cst_35 = arith.constant 9.99999974E-6 : f32
    %65 = vector.broadcast %cst_35 : f32 to vector<7x1xf32>
    %66 = arith.addf %62, %65 : vector<7x1xf32>
    %67 = math.rsqrt %66 : vector<7x1xf32>
    %68 = vector.broadcast %67 : vector<7x1xf32> to vector<7x32xf32>
    %69 = arith.mulf %64, %68 : vector<7x32xf32>
    %70 = vector.broadcast %50 : vector<1x32xf32> to vector<7x32xf32>
    %71 = arith.mulf %69, %70 : vector<7x32xf32>
    %72 = vector.broadcast %51 : vector<1x32xf32> to vector<7x32xf32>
    %73 = arith.addf %71, %72 : vector<7x32xf32>
    %cst_36 = arith.constant 5.000000e-01 : f32
    %74 = vector.broadcast %cst_36 : f32 to vector<7x32xf32>
    %75 = arith.mulf %74, %73 : vector<7x32xf32>
    %cst_37 = arith.constant 4.471500e-02 : f32
    %76 = vector.broadcast %cst_37 : f32 to vector<7x32xf32>
    %77 = arith.mulf %76, %73 : vector<7x32xf32>
    %78 = arith.mulf %77, %73 : vector<7x32xf32>
    %79 = arith.mulf %78, %73 : vector<7x32xf32>
    %80 = arith.addf %73, %79 : vector<7x32xf32>
    %cst_38 = arith.constant 0.797884583 : f32
    %81 = vector.broadcast %cst_38 : f32 to vector<7x32xf32>
    %82 = arith.mulf %81, %80 : vector<7x32xf32>
    %83 = math.tanh %82 : vector<7x32xf32>
    %cst_39 = arith.constant 1.000000e+00 : f32
    %84 = vector.broadcast %cst_39 : f32 to vector<7x32xf32>
    %85 = arith.addf %84, %83 : vector<7x32xf32>
    %86 = arith.mulf %75, %85 : vector<7x32xf32>
    %c0_40 = arith.constant 0 : index
    %c0_41 = arith.constant 0 : index
    %87 = vector.load %arg11[%c0_40, %c0_41] : memref<32x32xf32, #tpu.memory_space<vmem>>, vector<32x32xf32>
    %cst_42 = arith.constant dense<0.000000e+00> : vector<7x32xf32>
    %88 = tpu.matmul %86, %87, %cst_42 {dimension_numbers = #tpu.dot_dimension_numbers<[1], [0], [0], [1], [0, 0, 1, 1], [], []>} : vector<7x32xf32>, vector<32x32xf32>, vector<7x32xf32> -> vector<7x32xf32>
    %c0_43 = arith.constant 0 : index
    %c0_44 = arith.constant 0 : index
    %89 = vector.load %arg12[%c0_43, %c0_44] : memref<1x32xf32, #tpu.memory_space<vmem>>, vector<1x32xf32>
    %90 = vector.broadcast %89 : vector<1x32xf32> to vector<7x32xf32>
    %91 = arith.addf %88, %90 : vector<7x32xf32>
    %c0_45 = arith.constant 0 : index
    %c0_46 = arith.constant 0 : index
    %92 = vector.load %arg25[%c0_45, %c0_46] : memref<7x32xf32, #tpu.memory_space<vmem>>, vector<7x32xf32>
    tpu.vector_store %arg25[%c0_45, %c0_46], %91 {strides = array<i32>} : memref<7x32xf32, #tpu.memory_space<vmem>>, vector<7x32xf32>,
    %c0_47 = arith.constant 0 : index
    %c0_48 = arith.constant 0 : index
    %93 = vector.load %arg13[%c0_47, %c0_48] : memref<32x48xf32, #tpu.memory_space<vmem>>, vector<32x48xf32>
    %c0_49 = arith.constant 0 : index
    %c0_50 = arith.constant 0 : index
    %94 = vector.load %arg14[%c0_49, %c0_50] : memref<48x32xf32, #tpu.memory_space<vmem>>, vector<48x32xf32>
    %cst_51 = arith.constant dense<0.000000e+00> : vector<32x32xf32>
    %95 = tpu.matmul %93, %94, %cst_51 {dimension_numbers = #tpu.dot_dimension_numbers<[1], [0], [0], [1], [0, 0, 1, 1], [], []>} : vector<32x48xf32>, vector<48x32xf32>, vector<32x32xf32> -> vector<32x32xf32>
    %c0_52 = arith.constant 0 : index
    %c0_53 = arith.constant 0 : index
    %96 = vector.load %arg15[%c0_52, %c0_53] : memref<1x32xf32, #tpu.memory_space<vmem>>, vector<1x32xf32>
    %97 = vector.broadcast %96 : vector<1x32xf32> to vector<32x32xf32>
    %98 = arith.addf %95, %97 : vector<32x32xf32>
    %c0_54 = arith.constant 0 : index
    %c0_55 = arith.constant 0 : index
    %99 = vector.load %arg16[%c0_54, %c0_55] : memref<2x12xf32, #tpu.memory_space<vmem>>, vector<2x12xf32>
    %cst_56 = arith.constant dense<0.000000e+00> : vector<2x32xf32>
    %100 = tpu.matmul %99, %42, %cst_56 {dimension_numbers = #tpu.dot_dimension_numbers<[1], [0], [0], [1], [0, 0, 1, 1], [], []>} : vector<2x12xf32>, vector<12x32xf32>, vector<2x32xf32> -> vector<2x32xf32>
    %c0_57 = arith.constant 0 : index
    %c0_58 = arith.constant 0 : index
    %101 = vector.load %arg17[%c0_57, %c0_58] : memref<2x32xf32, #tpu.memory_space<vmem>>, vector<2x32xf32>
    %cst_59 = arith.constant dense<0.000000e+00> : vector<2x32xf32>
    %102 = tpu.matmul %101, %98, %cst_59 {dimension_numbers = #tpu.dot_dimension_numbers<[1], [0], [0], [1], [0, 0, 1, 1], [], []>} : vector<2x32xf32>, vector<32x32xf32>, vector<2x32xf32> -> vector<2x32xf32>
    %c0_60 = arith.constant 0 : index
    %c0_61 = arith.constant 0 : index
    %103 = vector.load %arg18[%c0_60, %c0_61] : memref<2x32xf32, #tpu.memory_space<vmem>>, vector<2x32xf32>
    %cst_62 = arith.constant dense<0.000000e+00> : vector<2x32xf32>
    %104 = tpu.matmul %103, %98, %cst_62 {dimension_numbers = #tpu.dot_dimension_numbers<[1], [0], [0], [1], [0, 0, 1, 1], [], []>} : vector<2x32xf32>, vector<32x32xf32>, vector<2x32xf32> -> vector<2x32xf32>
    %c0_63 = arith.constant 0 : index
    %c0_64 = arith.constant 0 : index
    %105 = vector.load %arg19[%c0_63, %c0_64] : memref<32x16xf32, #tpu.memory_space<vmem>>, vector<32x16xf32>
    %cst_65 = arith.constant dense<0.000000e+00> : vector<2x16xf32>
    %106 = tpu.matmul %100, %105, %cst_65 {dimension_numbers = #tpu.dot_dimension_numbers<[1], [0], [0], [1], [0, 0, 1, 1], [], []>} : vector<2x32xf32>, vector<32x16xf32>, vector<2x16xf32> -> vector<2x16xf32>
    %c0_66 = arith.constant 0 : index
    %c0_67 = arith.constant 0 : index
    %107 = vector.load %arg20[%c0_66, %c0_67] : memref<1x16xf32, #tpu.memory_space<vmem>>, vector<1x16xf32>
    %108 = vector.broadcast %107 : vector<1x16xf32> to vector<2x16xf32>
    %109 = arith.addf %106, %108 : vector<2x16xf32>
    %c0_68 = arith.constant 0 : index
    %c0_69 = arith.constant 0 : index
    %110 = vector.load %arg21[%c0_68, %c0_69] : memref<32x16xf32, #tpu.memory_space<vmem>>, vector<32x16xf32>
    %cst_70 = arith.constant dense<0.000000e+00> : vector<2x16xf32>
    %111 = tpu.matmul %102, %110, %cst_70 {dimension_numbers = #tpu.dot_dimension_numbers<[1], [0], [0], [1], [0, 0, 1, 1], [], []>} : vector<2x32xf32>, vector<32x16xf32>, vector<2x16xf32> -> vector<2x16xf32>
    %c0_71 = arith.constant 0 : index
    %c0_72 = arith.constant 0 : index
    %112 = vector.load %arg22[%c0_71, %c0_72] : memref<1x16xf32, #tpu.memory_space<vmem>>, vector<1x16xf32>
    %113 = vector.broadcast %112 : vector<1x16xf32> to vector<2x16xf32>
    %114 = arith.addf %111, %113 : vector<2x16xf32>
    %c0_73 = arith.constant 0 : index
    %c0_74 = arith.constant 0 : index
    %115 = vector.load %arg21[%c0_73, %c0_74] : memref<32x16xf32, #tpu.memory_space<vmem>>, vector<32x16xf32>
    %cst_75 = arith.constant dense<0.000000e+00> : vector<2x16xf32>
    %116 = tpu.matmul %104, %115, %cst_75 {dimension_numbers = #tpu.dot_dimension_numbers<[1], [0], [0], [1], [0, 0, 1, 1], [], []>} : vector<2x32xf32>, vector<32x16xf32>, vector<2x16xf32> -> vector<2x16xf32>
    %c0_76 = arith.constant 0 : index
    %c0_77 = arith.constant 0 : index
    %117 = vector.load %arg22[%c0_76, %c0_77] : memref<1x16xf32, #tpu.memory_space<vmem>>, vector<1x16xf32>
    %118 = vector.broadcast %117 : vector<1x16xf32> to vector<2x16xf32>
    %119 = arith.addf %116, %118 : vector<2x16xf32>
    %120 = arith.mulf %109, %109 : vector<2x16xf32>
    %cst_78 = arith.constant dense<0.000000e+00> : vector<2xf32>
    %121 = vector.multi_reduction <add>, %120, %cst_78 [1] : vector<2x16xf32> to vector<2xf32>
    %122 = vector.shape_cast %121 : vector<2xf32> to vector<2x1xf32>
    %cst_79 = arith.constant 9.99999996E-13 : f32
    %123 = vector.broadcast %cst_79 : f32 to vector<2x1xf32>
    %124 = arith.addf %122, %123 : vector<2x1xf32>
    %125 = math.rsqrt %124 : vector<2x1xf32>
    %126 = vector.broadcast %125 : vector<2x1xf32> to vector<2x16xf32>
    %127 = arith.mulf %109, %126 : vector<2x16xf32>
    %128 = arith.mulf %114, %114 : vector<2x16xf32>
    %cst_80 = arith.constant dense<0.000000e+00> : vector<2xf32>
    %129 = vector.multi_reduction <add>, %128, %cst_80 [1] : vector<2x16xf32> to vector<2xf32>
    %130 = vector.shape_cast %129 : vector<2xf32> to vector<2x1xf32>
    %cst_81 = arith.constant 9.99999996E-13 : f32
    %131 = vector.broadcast %cst_81 : f32 to vector<2x1xf32>
    %132 = arith.addf %130, %131 : vector<2x1xf32>
    %133 = math.rsqrt %132 : vector<2x1xf32>
    %134 = vector.broadcast %133 : vector<2x1xf32> to vector<2x16xf32>
    %135 = arith.mulf %114, %134 : vector<2x16xf32>
    %136 = arith.mulf %119, %119 : vector<2x16xf32>
    %cst_82 = arith.constant dense<0.000000e+00> : vector<2xf32>
    %137 = vector.multi_reduction <add>, %136, %cst_82 [1] : vector<2x16xf32> to vector<2xf32>
    %138 = vector.shape_cast %137 : vector<2xf32> to vector<2x1xf32>
    %cst_83 = arith.constant 9.99999996E-13 : f32
    %139 = vector.broadcast %cst_83 : f32 to vector<2x1xf32>
    %140 = arith.addf %138, %139 : vector<2x1xf32>
    %141 = math.rsqrt %140 : vector<2x1xf32>
    %142 = vector.broadcast %141 : vector<2x1xf32> to vector<2x16xf32>
    %143 = arith.mulf %119, %142 : vector<2x16xf32>
    %144 = arith.mulf %127, %135 : vector<2x16xf32>
    %cst_84 = arith.constant dense<0.000000e+00> : vector<2xf32>
    %145 = vector.multi_reduction <add>, %144, %cst_84 [1] : vector<2x16xf32> to vector<2xf32>
    %146 = vector.shape_cast %145 : vector<2xf32> to vector<2x1xf32>
    %147 = arith.mulf %127, %143 : vector<2x16xf32>
    %cst_85 = arith.constant dense<0.000000e+00> : vector<2xf32>
    %148 = vector.multi_reduction <add>, %147, %cst_85 [1] : vector<2x16xf32> to vector<2xf32>
    %149 = vector.shape_cast %148 : vector<2xf32> to vector<2x1xf32>
    %150 = math.exp %146 : vector<2x1xf32>
    %cst_86 = arith.constant 9.08430229E-5 : f32
    %151 = vector.broadcast %cst_86 : f32 to vector<2x1xf32>
    %152 = arith.addf %150, %151 : vector<2x1xf32>
    %153 = math.log %152 : vector<2x1xf32>
    %154 = arith.subf %146, %153 : vector<2x1xf32>
    %cst_87 = arith.constant 9.08430229E-5 : f32
    %155 = math.log %cst_87 : f32
    %156 = math.exp %149 : vector<2x1xf32>
    %cst_88 = arith.constant 9.08430229E-5 : f32
    %157 = vector.broadcast %cst_88 : f32 to vector<2x1xf32>
    %158 = arith.addf %156, %157 : vector<2x1xf32>
    %159 = math.log %158 : vector<2x1xf32>
    %160 = vector.broadcast %155 : f32 to vector<2x1xf32>
    %161 = arith.subf %160, %159 : vector<2x1xf32>
    %162 = vector.shape_cast %154 : vector<2x1xf32> to vector<1x2x1xf32>
    %cst_89 = arith.constant dense<0.000000e+00> : vector<1xf32>
    %163 = vector.multi_reduction <add>, %162, %cst_89 [1, 2] : vector<1x2x1xf32> to vector<1xf32>
    %164 = vector.shape_cast %163 : vector<1xf32> to vector<1x1x1xf32>
    %165 = vector.extract %164[0, 0, 0] : f32 from vector<1x1x1xf32>
    %cst_90 = arith.constant 2.000000e+00 : f32
    %166 = arith.divf %165, %cst_90 : f32
    %cst_91 = arith.constant 0.000000e+00 : f32
    %167 = arith.subf %cst_91, %166 : f32
    %168 = vector.shape_cast %161 : vector<2x1xf32> to vector<1x2x1xf32>
    %cst_92 = arith.constant dense<0.000000e+00> : vector<1xf32>
    %169 = vector.multi_reduction <add>, %168, %cst_92 [1, 2] : vector<1x2x1xf32> to vector<1xf32>
    %170 = vector.shape_cast %169 : vector<1xf32> to vector<1x1x1xf32>
    %171 = vector.extract %170[0, 0, 0] : f32 from vector<1x1x1xf32>
    %cst_93 = arith.constant 2.000000e+00 : f32
    %172 = arith.divf %171, %cst_93 : f32
    %173 = arith.subf %167, %172 : f32
    %174 = vector.broadcast %173 : f32 to vector<1x1xf32>
    %c0_94 = arith.constant 0 : index
    %c0_95 = arith.constant 0 : index
    %175 = vector.load %arg23[%c0_94, %c0_95] : memref<1x1xf32, #tpu.memory_space<vmem>>, vector<1x1xf32>
    tpu.vector_store %arg23[%c0_94, %c0_95], %174 {strides = array<i32>} : memref<1x1xf32, #tpu.memory_space<vmem>>, vector<1x1xf32>,
    return
  }
  func.func @transform_0(%arg0: i32) -> (i32, i32) {
    %c0_i32 = arith.constant 0 : i32
    %c0_i32_0 = arith.constant 0 : i32
    %c0_i32_1 = arith.constant 0 : i32
    return %c0_i32, %c0_i32_0 : i32, i32
  }
  func.func @transform_1(%arg0: i32) -> (i32, i32) {
    %c0_i32 = arith.constant 0 : i32
    %c0_i32_0 = arith.constant 0 : i32
    %c0_i32_1 = arith.constant 0 : i32
    return %c0_i32, %c0_i32_0 : i32, i32
  }
  func.func @transform_2(%arg0: i32) -> (i32, i32) {
    %c0_i32 = arith.constant 0 : i32
    %c0_i32_0 = arith.constant 0 : i32
    %c0_i32_1 = arith.constant 0 : i32
    return %c0_i32, %c0_i32_0 : i32, i32
  }
  func.func @transform_3(%arg0: i32) -> (i32, i32) {
    %c0_i32 = arith.constant 0 : i32
    %c0_i32_0 = arith.constant 0 : i32
    %c0_i32_1 = arith.constant 0 : i32
    return %c0_i32, %c0_i32_0 : i32, i32
  }
  func.func @transform_4(%arg0: i32) -> (i32, i32) {
    %c0_i32 = arith.constant 0 : i32
    %c0_i32_0 = arith.constant 0 : i32
    %c0_i32_1 = arith.constant 0 : i32
    return %c0_i32, %c0_i32_0 : i32, i32
  }
  func.func @transform_5(%arg0: i32) -> (i32, i32) {
    %c0_i32 = arith.constant 0 : i32
    %c0_i32_0 = arith.constant 0 : i32
    %c0_i32_1 = arith.constant 0 : i32
    return %c0_i32, %c0_i32_0 : i32, i32
  }
  func.func @transform_6(%arg0: i32) -> (i32, i32) {
    %c0_i32 = arith.constant 0 : i32
    %c0_i32_0 = arith.constant 0 : i32
    %c0_i32_1 = arith.constant 0 : i32
    return %c0_i32, %c0_i32_0 : i32, i32
  }
  func.func @transform_7(%arg0: i32) -> (i32, i32) {
    %c0_i32 = arith.constant 0 : i32
    %c0_i32_0 = arith.constant 0 : i32
    %c0_i32_1 = arith.constant 0 : i32
    return %c0_i32, %c0_i32_0 : i32, i32
  }
  func.func @transform_8(%arg0: i32) -> (i32, i32) {
    %c0_i32 = arith.constant 0 : i32
    %c0_i32_0 = arith.constant 0 : i32
    %c0_i32_1 = arith.constant 0 : i32
    return %c0_i32, %c0_i32_0 : i32, i32
  }
  func.func @transform_9(%arg0: i32) -> (i32, i32) {
    %c0_i32 = arith.constant 0 : i32
    %c0_i32_0 = arith.constant 0 : i32
    %c0_i32_1 = arith.constant 0 : i32
    return %c0_i32, %c0_i32_0 : i32, i32
  }
  func.func @transform_10(%arg0: i32) -> (i32, i32) {
    %c0_i32 = arith.constant 0 : i32
    %c0_i32_0 = arith.constant 0 : i32
    %c0_i32_1 = arith.constant 0 : i32
    return %c0_i32, %c0_i32_0 : i32, i32
  }
  func.func @transform_11(%arg0: i32) -> (i32, i32) {
    %c0_i32 = arith.constant 0 : i32
    %c0_i32_0 = arith.constant 0 : i32
    %c0_i32_1 = arith.constant 0 : i32
    return %c0_i32, %c0_i32_0 : i32, i32
  }
  func.func @transform_12(%arg0: i32) -> (i32, i32) {
    %c0_i32 = arith.constant 0 : i32
    %c0_i32_0 = arith.constant 0 : i32
    %c0_i32_1 = arith.constant 0 : i32
    return %c0_i32, %c0_i32_0 : i32, i32
  }
  func.func @transform_13(%arg0: i32) -> (i32, i32) {
    %c0_i32 = arith.constant 0 : i32
    %c0_i32_0 = arith.constant 0 : i32
    %c0_i32_1 = arith.constant 0 : i32
    return %c0_i32, %c0_i32_0 : i32, i32
  }
  func.func @transform_14(%arg0: i32) -> (i32, i32) {
    %c0_i32 = arith.constant 0 : i32
    %c0_i32_0 = arith.constant 0 : i32
    %c0_i32_1 = arith.constant 0 : i32
    return %c0_i32, %c0_i32_0 : i32, i32
  }
  func.func @transform_15(%arg0: i32) -> (i32, i32) {
    %c0_i32 = arith.constant 0 : i32
    %c0_i32_0 = arith.constant 0 : i32
    %c0_i32_1 = arith.constant 0 : i32
    return %c0_i32, %c0_i32_0 : i32, i32
  }
  func.func @transform_16(%arg0: i32) -> (i32, i32) {
    %c0_i32 = arith.constant 0 : i32
    %c0_i32_0 = arith.constant 0 : i32
    %c0_i32_1 = arith.constant 0 : i32
    return %c0_i32, %c0_i32_0 : i32, i32
  }
  func.func @transform_17(%arg0: i32) -> (i32, i32) {
    %c0_i32 = arith.constant 0 : i32
    %c0_i32_0 = arith.constant 0 : i32
    %c0_i32_1 = arith.constant 0 : i32
    return %c0_i32, %c0_i32_0 : i32, i32
  }
  func.func @transform_18(%arg0: i32) -> (i32, i32) {
    %c0_i32 = arith.constant 0 : i32
    %c0_i32_0 = arith.constant 0 : i32
    %c0_i32_1 = arith.constant 0 : i32
    return %c0_i32, %c0_i32_0 : i32, i32
  }
  func.func @transform_19(%arg0: i32) -> (i32, i32) {
    %c0_i32 = arith.constant 0 : i32
    %c0_i32_0 = arith.constant 0 : i32
    %c0_i32_1 = arith.constant 0 : i32
    return %c0_i32, %c0_i32_0 : i32, i32
  }
  func.func @transform_20(%arg0: i32) -> (i32, i32) {
    %c0_i32 = arith.constant 0 : i32
    %c0_i32_0 = arith.constant 0 : i32
    %c0_i32_1 = arith.constant 0 : i32
    return %c0_i32, %c0_i32_0 : i32, i32
  }
  func.func @transform_21(%arg0: i32) -> (i32, i32) {
    %c0_i32 = arith.constant 0 : i32
    %c0_i32_0 = arith.constant 0 : i32
    %c0_i32_1 = arith.constant 0 : i32
    return %c0_i32, %c0_i32_0 : i32, i32
  }
  func.func @transform_22(%arg0: i32) -> (i32, i32) {
    %c0_i32 = arith.constant 0 : i32
    %c0_i32_0 = arith.constant 0 : i32
    %c0_i32_1 = arith.constant 0 : i32
    return %c0_i32, %c0_i32_0 : i32, i32
  }
  func.func @transform_23(%arg0: i32) -> (i32, i32) {
    %c0_i32 = arith.constant 0 : i32
    %c0_i32_0 = arith.constant 0 : i32
    %c0_i32_1 = arith.constant 0 : i32
    return %c0_i32, %c0_i32_0 : i32, i32
  }
  func.func @transform_24(%arg0: i32) -> (i32, i32) {
    %c0_i32 = arith.constant 0 : i32
    %c0_i32_0 = arith.constant 0 : i32
    %c0_i32_1 = arith.constant 0 : i32
    return %c0_i32, %c0_i32_0 : i32, i32
  }
}

</mosaic_0001>

<llo_original>
// kernel: _fwd.1
$region0: #{_fwd.1}
  #allocation0 [shape = 'u32[]', space=smem, size = 0x4, offset = 0x4, fixed_abs, tag = 'smem constant byte address 0x4 - core index']
  #allocation1 [shape = 'u32[72,128]{1,0:T(1,128)}', space=vmem, size = 0x9000, scoped, tag = 'internal scratch']
  %s0 = inlined_call_operand.vmem [shape: f32[12,32], index: 0, kind: input, shape index: {}]
  %s1 = inlined_call_operand.vmem [shape: f32[1,32], index: 1, kind: input, shape index: {}]
  %s2 = inlined_call_operand.vmem [shape: f32[1,32], index: 2, kind: input, shape index: {}]
  %s3 = inlined_call_operand.vmem [shape: f32[32,32], index: 3, kind: input, shape index: {}]
  %s4 = inlined_call_operand.vmem [shape: f32[1,32], index: 4, kind: input, shape index: {}]
  %s5 = inlined_call_operand.vmem [shape: f32[7,41], index: 5, kind: input, shape index: {}]
  %s6 = inlined_call_operand.vmem [shape: f32[41,32], index: 6, kind: input, shape index: {}]
  %s7 = inlined_call_operand.vmem [shape: f32[1,32], index: 7, kind: input, shape index: {}]
  %s8 = inlined_call_operand.vmem [shape: f32[1,32], index: 8, kind: input, shape index: {}]
  %s9 = inlined_call_operand.vmem [shape: f32[1,32], index: 9, kind: input, shape index: {}]
  %s10 = inlined_call_operand.vmem [shape: f32[32,32], index: 10, kind: input, shape index: {}]
  %s11 = inlined_call_operand.vmem [shape: f32[1,32], index: 11, kind: input, shape index: {}]
  %s12 = inlined_call_operand.vmem [shape: f32[32,48], index: 12, kind: input, shape index: {}]
  %s13 = inlined_call_operand.vmem [shape: f32[48,32], index: 13, kind: input, shape index: {}]
  %s14 = inlined_call_operand.vmem [shape: f32[1,32], index: 14, kind: input, shape index: {}]
  %s15 = inlined_call_operand.vmem [shape: f32[2,12], index: 15, kind: input, shape index: {}]
  %s16 = inlined_call_operand.vmem [shape: f32[2,32], index: 16, kind: input, shape index: {}]
  %s17 = inlined_call_operand.vmem [shape: f32[2,32], index: 17, kind: input, shape index: {}]
  %s18 = inlined_call_operand.vmem [shape: f32[32,16], index: 18, kind: input, shape index: {}]
  %s19 = inlined_call_operand.vmem [shape: f32[1,16], index: 19, kind: input, shape index: {}]
  %s20 = inlined_call_operand.vmem [shape: f32[32,16], index: 20, kind: input, shape index: {}]
  %s21 = inlined_call_operand.vmem [shape: f32[1,16], index: 21, kind: input, shape index: {}]
  %s22 = inlined_call_operand.hbm [shape: f32[1,1], index: 22, kind: output, shape index: {0}]
  %s23 = inlined_call_operand.hbm [shape: f32[12,32], index: 23, kind: output, shape index: {1}]
  %s24 = inlined_call_operand.hbm [shape: f32[7,32], index: 24, kind: output, shape index: {2}]
  %25 = xla_tuple %s22, %s23, %s24
  %s26 = sld [smem:[#allocation0]]
  $region114: #{_fwd.1} parent=0
    _
  %s28 = ssub.s32 1, %s26
  %s29 = scalar_select 0, %s28, %s26
  $region1: #{_fwd.1} parent=0
    #allocation2 [shape = 'u8[512]{0}', space=vmem, size = 0x400, scoped, tag = 'output window, operand 0, single buffered']
    #allocation3 [shape = 's32[1]{0}', space=sflag, size = 0x4, scoped, tag = 'scoped memory for _fwd.1']
    #allocation4 [shape = 'u8[8192]{0}', space=vmem, size = 0x2000, scoped, tag = 'output window, operand 1, single buffered']
    #allocation5 [shape = 's32[1]{0}', space=sflag, size = 0x4, scoped, tag = 'scoped memory for _fwd.1']
    #allocation6 [shape = 'u8[4096]{0}', space=vmem, size = 0x1000, scoped, tag = 'output window, operand 2, single buffered']
    %30 = vsyncpa [#allocation3], 0
    %31 = vsyncpa [#allocation5], 0
    // Predicated region
    $region2: #{_fwd.1} parent=1 // pred_check
      _
    $region3: #{_fwd.1} parent=1 // pred_check_branch
      %33 = sbr.rel (0) target = $region5
    $region4: #{_fwd.1} parent=1 // pred_region
      _
    $region5: #{_fwd.1} parent=1 // pred_fallthru
      _
    // Predicated region
    $region6: #{_fwd.1} parent=1 // pred_check
      _
    $region7: #{_fwd.1} parent=1 // pred_check_branch
      %35 = sbr.rel (0) target = $region9
    $region8: #{_fwd.1} parent=1 // pred_region
      _
    $region9: #{_fwd.1} parent=1 // pred_fallthru
      _
    // Predicated region
    $region10: #{_fwd.1} parent=1 // pred_check
      _
    $region11: #{_fwd.1} parent=1 // pred_check_branch
      %37 = sbr.rel (0) target = $region13
    $region12: #{_fwd.1} parent=1 // pred_region
      _
    $region13: #{_fwd.1} parent=1 // pred_fallthru
      _
    // Predicated region
    $region14: #{_fwd.1} parent=1 // pred_check
      _
    $region15: #{_fwd.1} parent=1 // pred_check_branch
      %39 = sbr.rel (0) target = $region17
    $region16: #{_fwd.1} parent=1 // pred_region
      _
    $region17: #{_fwd.1} parent=1 // pred_fallthru
      _
    // Predicated region
    $region18: #{_fwd.1} parent=1 // pred_check
      _
    $region19: #{_fwd.1} parent=1 // pred_check_branch
      %41 = sbr.rel (0) target = $region21
    $region20: #{_fwd.1} parent=1 // pred_region
      _
    $region21: #{_fwd.1} parent=1 // pred_fallthru
      _
    // Predicated region
    $region22: #{_fwd.1} parent=1 // pred_check
      _
    $region23: #{_fwd.1} parent=1 // pred_check_branch
      %43 = sbr.rel (0) target = $region25
    $region24: #{_fwd.1} parent=1 // pred_region
      _
    $region25: #{_fwd.1} parent=1 // pred_fallthru
      _
    // Predicated region
    $region26: #{_fwd.1} parent=1 // pred_check
      _
    $region27: #{_fwd.1} parent=1 // pred_check_branch
      %45 = sbr.rel (0) target = $region29
    $region28: #{_fwd.1} parent=1 // pred_region
      _
    $region29: #{_fwd.1} parent=1 // pred_fallthru
      _
    // Predicated region
    $region30: #{_fwd.1} parent=1 // pred_check
      _
    $region31: #{_fwd.1} parent=1 // pred_check_branch
      %47 = sbr.rel (0) target = $region33
    $region32: #{_fwd.1} parent=1 // pred_region
      _
    $region33: #{_fwd.1} parent=1 // pred_fallthru
      _
    // Predicated region
    $region34: #{_fwd.1} parent=1 // pred_check
      _
    $region35: #{_fwd.1} parent=1 // pred_check_branch
      %49 = sbr.rel (0) target = $region37
    $region36: #{_fwd.1} parent=1 // pred_region
      _
    $region37: #{_fwd.1} parent=1 // pred_fallthru
      _
    // Predicated region
    $region38: #{_fwd.1} parent=1 // pred_check
      _
    $region39: #{_fwd.1} parent=1 // pred_check_branch
      %51 = sbr.rel (0) target = $region41
    $region40: #{_fwd.1} parent=1 // pred_region
      _
    $region41: #{_fwd.1} parent=1 // pred_fallthru
      _
    // Predicated region
    $region42: #{_fwd.1} parent=1 // pred_check
      _
    $region43: #{_fwd.1} parent=1 // pred_check_branch
      %53 = sbr.rel (0) target = $region45
    $region44: #{_fwd.1} parent=1 // pred_region
      _
    $region45: #{_fwd.1} parent=1 // pred_fallthru
      _
    // Predicated region
    $region46: #{_fwd.1} parent=1 // pred_check
      _
    $region47: #{_fwd.1} parent=1 // pred_check_branch
      %55 = sbr.rel (0) target = $region49
    $region48: #{_fwd.1} parent=1 // pred_region
      _
    $region49: #{_fwd.1} parent=1 // pred_fallthru
      _
    // Predicated region
    $region50: #{_fwd.1} parent=1 // pred_check
      _
    $region51: #{_fwd.1} parent=1 // pred_check_branch
      %57 = sbr.rel (0) target = $region53
    $region52: #{_fwd.1} parent=1 // pred_region
      _
    $region53: #{_fwd.1} parent=1 // pred_fallthru
      _
    // Predicated region
    $region54: #{_fwd.1} parent=1 // pred_check
      _
    $region55: #{_fwd.1} parent=1 // pred_check_branch
      %59 = sbr.rel (0) target = $region57
    $region56: #{_fwd.1} parent=1 // pred_region
      _
    $region57: #{_fwd.1} parent=1 // pred_fallthru
      _
    // Predicated region
    $region58: #{_fwd.1} parent=1 // pred_check
      _
    $region59: #{_fwd.1} parent=1 // pred_check_branch
      %61 = sbr.rel (0) target = $region61
    $region60: #{_fwd.1} parent=1 // pred_region
      _
    $region61: #{_fwd.1} parent=1 // pred_fallthru
      _
    // Predicated region
    $region62: #{_fwd.1} parent=1 // pred_check
      _
    $region63: #{_fwd.1} parent=1 // pred_check_branch
      %63 = sbr.rel (0) target = $region65
    $region64: #{_fwd.1} parent=1 // pred_region
      _
    $region65: #{_fwd.1} parent=1 // pred_fallthru
      _
    // Predicated region
    $region66: #{_fwd.1} parent=1 // pred_check
      _
    $region67: #{_fwd.1} parent=1 // pred_check_branch
      %65 = sbr.rel (0) target = $region69
    $region68: #{_fwd.1} parent=1 // pred_region
      _
    $region69: #{_fwd.1} parent=1 // pred_fallthru
      _
    // Predicated region
    $region70: #{_fwd.1} parent=1 // pred_check
      _
    $region71: #{_fwd.1} parent=1 // pred_check_branch
      %67 = sbr.rel (0) target = $region73
    $region72: #{_fwd.1} parent=1 // pred_region
      _
    $region73: #{_fwd.1} parent=1 // pred_fallthru
      _
    // Predicated region
    $region74: #{_fwd.1} parent=1 // pred_check
      _
    $region75: #{_fwd.1} parent=1 // pred_check_branch
      %69 = sbr.rel (0) target = $region77
    $region76: #{_fwd.1} parent=1 // pred_region
      _
    $region77: #{_fwd.1} parent=1 // pred_fallthru
      _
    // Predicated region
    $region78: #{_fwd.1} parent=1 // pred_check
      _
    $region79: #{_fwd.1} parent=1 // pred_check_branch
      %71 = sbr.rel (0) target = $region81
    $region80: #{_fwd.1} parent=1 // pred_region
      _
    $region81: #{_fwd.1} parent=1 // pred_fallthru
      _
    // Predicated region
    $region82: #{_fwd.1} parent=1 // pred_check
      _
    $region83: #{_fwd.1} parent=1 // pred_check_branch
      %73 = sbr.rel (0) target = $region85
    $region84: #{_fwd.1} parent=1 // pred_region
      _
    $region85: #{_fwd.1} parent=1 // pred_fallthru
      _
    // Predicated region
    $region86: #{_fwd.1} parent=1 // pred_check
      _
    $region87: #{_fwd.1} parent=1 // pred_check_branch
      %75 = sbr.rel (0) target = $region89
    $region88: #{_fwd.1} parent=1 // pred_region
      _
    $region89: #{_fwd.1} parent=1 // pred_fallthru
      _
    %v76 = vld [vmem:[%s0] sm:$0xff]
    %v77 = vld [vmem:[%s0 + $0x8] sm:$0xf]
    %v78 = vld [vmem:[%s1] sm:$0x1]
    %v79 = vld [vmem:[%s2] sm:$0x1]
    %vm80 = vcmask 261120
    %v81 = vsel %vm80, %v76, 0.0
    %82 = vadd.xlane.f32.xlu0 %v81
    %v83 = vpop.xlane.xlu0 %82
    %vm84 = vcmask 257024
    %v85 = vsel %vm84, %v77, 0.0
    %86 = vadd.xlane.f32.xlu0 %v85
    %v87 = vpop.xlane.xlu0 %86
    %v88 = vrcp.pop 32.0
    %v89 = vmul.f32 32.0, %v88
    %v90 = vsub.f32 1.0, %v89
    %v91 = vmul.f32 %v88, %v90
    %v92 = vadd.f32 %v88, %v91
    %vm93 = vweird.f32 %v88
    %v94 = vsel %vm93, %v88, %v92
    %v95 = vmul.f32 %v83, %v94
    %v96 = vmul.f32 %v87, %v94
    %v97 = vsub.f32 %v76, %v95
    %v98 = vsub.f32 %v77, %v96
    %v99 = vmul.f32 %v97, %v97
    %v100 = vmul.f32 %v98, %v98
    %v101 = vsel %vm80, %v99, 0.0
    %102 = vadd.xlane.f32.xlu0 %v101
    %v103 = vpop.xlane.xlu0 %102
    %v104 = vsel %vm84, %v100, 0.0
    %105 = vadd.xlane.f32.xlu0 %v104
    %v106 = vpop.xlane.xlu0 %105
    %v107 = vmul.f32 %v103, %v94
    %v108 = vmul.f32 %v106, %v94
    %v109 = vadd.f32 %v107, 1e-05
    %v110 = vadd.f32 %v108, 1e-05
    %v111 = vrsqrt.pop %v109
    %v112 = vmul.f32 %v111, %v109
    %v113 = vmul.f32 %v112, %v111
    %v114 = vmul.f32 0.5, %v113
    %v115 = vsub.f32 1.5, %v114
    %v116 = vmul.f32 %v111, %v115
    %vm117 = vweird.f32 %v109
    %vm118 = vweird.f32 %v111
    %vm119 = vmor %vm117, %vm118
    %v120 = vsel %vm119, %v111, %v116
    %v121 = vrsqrt.pop %v110
    %v122 = vmul.f32 %v121, %v110
    %v123 = vmul.f32 %v122, %v121
    %v124 = vmul.f32 0.5, %v123
    %v125 = vsub.f32 1.5, %v124
    %v126 = vmul.f32 %v121, %v125
    %vm127 = vweird.f32 %v110
    %vm128 = vweird.f32 %v121
    %vm129 = vmor %vm127, %vm128
    %v130 = vsel %vm129, %v121, %v126
    %v131 = vmul.f32 %v97, %v120
    %v132 = vmul.f32 %v98, %v130
    %v134 = vperm.slane %v78, 0
    %v136 = vmul.f32 %v131, %v134
    %v137 = vmul.f32 %v132, %v134
    %v139 = vperm.slane %v79, 0
    %v141 = vadd.f32 %v136, %v139
    %v142 = vadd.f32 %v137, %v139
    %v143 = vmul.f32 %v141, 0.5
    %v144 = vmul.f32 %v142, 0.5
    %v145 = vmul.f32 %v141, 0.044715
    %v146 = vmul.f32 %v142, 0.044715
    %v147 = vmul.f32 %v145, %v141
    %v148 = vmul.f32 %v146, %v142
    %v149 = vmul.f32 %v147, %v141
    %v150 = vmul.f32 %v148, %v142
    %v151 = vadd.f32 %v141, %v149
    %v152 = vadd.f32 %v142, %v150
    %v153 = vmul.f32 %v151, 0.7978846
    %v154 = vmul.f32 %v152, 0.7978846
    %v155 = vtanh.pop %v153
    %v156 = vtanh.pop %v154
    %v157 = vadd.f32 %v155, 1.0
    %v158 = vadd.f32 %v156, 1.0
    %v159 = vmul.f32 %v143, %v157
    %v160 = vmul.f32 %v144, %v158
    %v161 = vld [vmem:[%s3] sm:$0xff]
    %v162 = vld [vmem:[%s3 + $0x8] sm:$0xff]
    %v163 = vld [vmem:[%s3 + $0x10] sm:$0xff]
    %v164 = vld [vmem:[%s3 + $0x18] sm:$0xff]
    %v165 = vld [vmem:[%s4] sm:$0x1]
    %v167 = vperm.slane %v165, 0
    %v170 = vsel %vm80, %v159, 0
    %v173 = vsel %vm80, %v160, 0
    %175 = vmatpush.msra.mxu0 0.0
    %176 = vmatpush.msra.mxu0 0.0
    %177 = vmatpush.msra.mxu0 0.0
    %178 = vmatpush.msra.mxu0 0.0
    %179 = vmatpush.msra.mxu0 0.0
    %180 = vmatpush.msra.mxu0 0.0
    %181 = vmatpush.msra.mxu0 0.0
    %182 = vmatpush.msra.mxu0 0.0
    %183 = vmatpush.msra.mxu0 0.0
    %184 = vmatpush.msra.mxu0 0.0
    %185 = vmatpush.msra.mxu0 0.0
    %186 = vmatpush.msra.mxu0 0.0
    %187 = vmatpush.msra.mxu0 %v164
    %188 = vmatpush.msra.mxu0 %v163
    %189 = vmatpush.msra.mxu0 %v162
    %190 = vmatpush.msra.mxu0 %v161
    %191 = vmatmul.f32.gmra.mxu0 %v170
    %v192 = vpop.f32.mrf.mxu0
    %v193 = vadd.f32 %v167, %v192
    %194 = vmatmul.f32.gmra.mxu0 %v173
    %v195 = vpop.f32.mrf.mxu0
    %v196 = vadd.f32 %v167, %v195
    %197 = vdwg.mxu0
    %198 = vst.msk [vmem:[#allocation4] sm:$0xff] %vm80, %v193
    %199 = vst.msk [vmem:[#allocation4 + $0x8] sm:$0xf] %vm84, %v196
    %v200 = vld [vmem:[%s5] sm:$0x7f]
    %v201 = vld [vmem:[%s6] sm:$0xff]
    %v202 = vld [vmem:[%s6 + $0x8] sm:$0xff]
    %v203 = vld [vmem:[%s6 + $0x10] sm:$0xff]
    %v204 = vld [vmem:[%s6 + $0x18] sm:$0xff]
    %v205 = vld [vmem:[%s6 + $0x20] sm:$0xff]
    %v206 = vld [vmem:[%s6 + $0x28] sm:$0x1]
    %v207 = vld [vmem:[%s7] sm:$0x1]
    %v209 = vperm.slane %v207, 0
    %vm211 = vcmask 334848
    %v213 = vsel %vm211, %v200, 0
    %vm215 = vcmask 1040384
    %v217 = vsel %vm215, %v206, 0
    %219 = vmatpush.msra.mxu0 0.0
    %220 = vmatpush.msra.mxu0 0.0
    %221 = vmatpush.msra.mxu0 0.0
    %222 = vmatpush.msra.mxu0 0.0
    %223 = vmatpush.msra.mxu0 0.0
    %224 = vmatpush.msra.mxu0 0.0
    %225 = vmatpush.msra.mxu0 0.0
    %226 = vmatpush.msra.mxu0 0.0
    %227 = vmatpush.msra.mxu0 0.0
    %228 = vmatpush.msra.mxu0 0.0
    %229 = vmatpush.msra.mxu0 %v217
    %230 = vmatpush.msra.mxu0 %v205
    %231 = vmatpush.msra.mxu0 %v204
    %232 = vmatpush.msra.mxu0 %v203
    %233 = vmatpush.msra.mxu0 %v202
    %234 = vmatpush.msra.mxu0 %v201
    %235 = vmatmul.f32.gmra.mxu0 %v213
    %v236 = vpop.f32.mrf.mxu0
    %v237 = vadd.f32 %v209, %v236
    %238 = vdwg.mxu0
    %v239 = vld [vmem:[%s8] sm:$0x1]
    %v240 = vld [vmem:[%s9] sm:$0x1]
    %vm241 = vcmask 260096
    %v242 = vsel %vm241, %v237, 0.0
    %243 = vadd.xlane.f32.xlu0 %v242
    %v244 = vpop.xlane.xlu0 %243
    %v245 = vmul.f32 %v244, %v94
    %v246 = vsub.f32 %v237, %v245
    %v247 = vmul.f32 %v246, %v246
    %v248 = vsel %vm241, %v247, 0.0
    %249 = vadd.xlane.f32.xlu0 %v248
    %v250 = vpop.xlane.xlu0 %249
    %v251 = vmul.f32 %v250, %v94
    %v252 = vadd.f32 %v251, 1e-05
    %v253 = vrsqrt.pop %v252
    %v254 = vmul.f32 %v253, %v252
    %v255 = vmul.f32 %v254, %v253
    %v256 = vmul.f32 0.5, %v255
    %v257 = vsub.f32 1.5, %v256
    %v258 = vmul.f32 %v253, %v257
    %vm259 = vweird.f32 %v252
    %vm260 = vweird.f32 %v253
    %vm261 = vmor %vm259, %vm260
    %v262 = vsel %vm261, %v253, %v258
    %v263 = vmul.f32 %v246, %v262
    %v265 = vperm.slane %v239, 0
    %v267 = vmul.f32 %v263, %v265
    %v269 = vperm.slane %v240, 0
    %v271 = vadd.f32 %v267, %v269
    %v272 = vmul.f32 %v271, 0.5
    %v273 = vmul.f32 %v271, 0.044715
    %v274 = vmul.f32 %v273, %v271
    %v275 = vmul.f32 %v274, %v271
    %v276 = vadd.f32 %v271, %v275
    %v277 = vmul.f32 %v276, 0.7978846
    %v278 = vtanh.pop %v277
    %v279 = vadd.f32 %v278, 1.0
    %v280 = vmul.f32 %v272, %v279
    %v281 = vld [vmem:[%s10] sm:$0xff]
    %v282 = vld [vmem:[%s10 + $0x8] sm:$0xff]
    %v283 = vld [vmem:[%s10 + $0x10] sm:$0xff]
    %v284 = vld [vmem:[%s10 + $0x18] sm:$0xff]
    %v285 = vld [vmem:[%s11] sm:$0x1]
    %v287 = vperm.slane %v285, 0
    %v290 = vsel %vm80, %v280, 0
    %292 = vmatpush.msra.mxu0 0.0
    %293 = vmatpush.msra.mxu0 0.0
    %294 = vmatpush.msra.mxu0 0.0
    %295 = vmatpush.msra.mxu0 0.0
    %296 = vmatpush.msra.mxu0 0.0
    %297 = vmatpush.msra.mxu0 0.0
    %298 = vmatpush.msra.mxu0 0.0
    %299 = vmatpush.msra.mxu0 0.0
    %300 = vmatpush.msra.mxu0 0.0
    %301 = vmatpush.msra.mxu0 0.0
    %302 = vmatpush.msra.mxu0 0.0
    %303 = vmatpush.msra.mxu0 0.0
    %304 = vmatpush.msra.mxu0 %v284
    %305 = vmatpush.msra.mxu0 %v283
    %306 = vmatpush.msra.mxu0 %v282
    %307 = vmatpush.msra.mxu0 %v281
    %308 = vmatmul.f32.gmra.mxu0 %v290
    %v309 = vpop.f32.mrf.mxu0
    %v310 = vadd.f32 %v287, %v309
    %311 = vdwg.mxu0
    %312 = vst.msk [vmem:[#allocation6] sm:$0x7f] %vm241, %v310
    %v313 = vld [vmem:[%s12] sm:$0xff]
    %v314 = vld [vmem:[%s12 + $0x8] sm:$0xff]
    %v315 = vld [vmem:[%s12 + $0x10] sm:$0xff]
    %v316 = vld [vmem:[%s12 + $0x18] sm:$0xff]
    %v317 = vld [vmem:[%s13] sm:$0xff]
    %v318 = vld [vmem:[%s13 + $0x8] sm:$0xff]
    %v319 = vld [vmem:[%s13 + $0x10] sm:$0xff]
    %v320 = vld [vmem:[%s13 + $0x18] sm:$0xff]
    %v321 = vld [vmem:[%s13 + $0x20] sm:$0xff]
    %v322 = vld [vmem:[%s13 + $0x28] sm:$0xff]
    %v323 = vld [vmem:[%s14] sm:$0x1]
    %v325 = vperm.slane %v323, 0
    %vm327 = vcmask 392192
    %v329 = vsel %vm327, %v313, 0
    %v332 = vsel %vm327, %v314, 0
    %v335 = vsel %vm327, %v315, 0
    %v338 = vsel %vm327, %v316, 0
    %340 = vmatpush.msra.mxu0 0.0
    %341 = vmatpush.msra.mxu0 0.0
    %342 = vmatpush.msra.mxu0 0.0
    %343 = vmatpush.msra.mxu0 0.0
    %344 = vmatpush.msra.mxu0 0.0
    %345 = vmatpush.msra.mxu0 0.0
    %346 = vmatpush.msra.mxu0 0.0
    %347 = vmatpush.msra.mxu0 0.0
    %348 = vmatpush.msra.mxu0 0.0
    %349 = vmatpush.msra.mxu0 0.0
    %350 = vmatpush.msra.mxu0 %v322
    %351 = vmatpush.msra.mxu0 %v321
    %352 = vmatpush.msra.mxu0 %v320
    %353 = vmatpush.msra.mxu0 %v319
    %354 = vmatpush.msra.mxu0 %v318
    %355 = vmatpush.msra.mxu0 %v317
    %356 = vmatmul.f32.gmra.mxu0 %v329
    %v357 = vpop.f32.mrf.mxu0
    %v358 = vadd.f32 %v325, %v357
    %359 = vmatmul.f32.gmra.mxu0 %v332
    %v360 = vpop.f32.mrf.mxu0
    %v361 = vadd.f32 %v325, %v360
    %362 = vmatmul.f32.gmra.mxu0 %v335
    %v363 = vpop.f32.mrf.mxu0
    %v364 = vadd.f32 %v325, %v363
    %365 = vmatmul.f32.gmra.mxu0 %v338
    %v366 = vpop.f32.mrf.mxu0
    %v367 = vadd.f32 %v325, %v366
    %368 = vdwg.mxu0
    %v369 = vld [vmem:[%s15] sm:$0x3]
    %vm370 = vcmask 97280
    %v372 = vsel %vm370, %v369, 0
    %vm374 = vcmask 1043456
    %v376 = vsel %vm374, %v196, 0
    %378 = vmatpush.msra.mxu0 0.0
    %379 = vmatpush.msra.mxu0 0.0
    %380 = vmatpush.msra.mxu0 0.0
    %381 = vmatpush.msra.mxu0 0.0
    %382 = vmatpush.msra.mxu0 0.0
    %383 = vmatpush.msra.mxu0 0.0
    %384 = vmatpush.msra.mxu0 0.0
    %385 = vmatpush.msra.mxu0 0.0
    %386 = vmatpush.msra.mxu0 0.0
    %387 = vmatpush.msra.mxu0 0.0
    %388 = vmatpush.msra.mxu0 0.0
    %389 = vmatpush.msra.mxu0 0.0
    %390 = vmatpush.msra.mxu0 0.0
    %391 = vmatpush.msra.mxu0 0.0
    %392 = vmatpush.msra.mxu0 %v376
    %393 = vmatpush.msra.mxu0 %v193
    %394 = vmatmul.f32.gmra.mxu0 %v372
    %v395 = vpop.f32.mrf.mxu0
    %v396 = vadd.f32 0.0, %v395
    %397 = vdwg.mxu0
    %v398 = vld [vmem:[%s16] sm:$0x3]
    %v400 = vsel %vm80, %v398, 0
    %402 = vmatpush.msra.mxu0 0.0
    %403 = vmatpush.msra.mxu0 0.0
    %404 = vmatpush.msra.mxu0 0.0
    %405 = vmatpush.msra.mxu0 0.0
    %406 = vmatpush.msra.mxu0 0.0
    %407 = vmatpush.msra.mxu0 0.0
    %408 = vmatpush.msra.mxu0 0.0
    %409 = vmatpush.msra.mxu0 0.0
    %410 = vmatpush.msra.mxu0 0.0
    %411 = vmatpush.msra.mxu0 0.0
    %412 = vmatpush.msra.mxu0 0.0
    %413 = vmatpush.msra.mxu0 0.0
    %414 = vmatpush.msra.mxu0 %v367
    %415 = vmatpush.msra.mxu0 %v364
    %416 = vmatpush.msra.mxu0 %v361
    %417 = vmatpush.msra.mxu0 %v358
    %418 = vmatmul.f32.gmra.mxu0 %v400
    %v419 = vpop.f32.mrf.mxu0
    %v420 = vadd.f32 0.0, %v419
    %421 = vdwg.mxu0
    %v422 = vld [vmem:[%s17] sm:$0x3]
    %v424 = vsel %vm80, %v422, 0
    %426 = vmatpush.msra.mxu0 0.0
    %427 = vmatpush.msra.mxu0 0.0
    %428 = vmatpush.msra.mxu0 0.0
    %429 = vmatpush.msra.mxu0 0.0
    %430 = vmatpush.msra.mxu0 0.0
    %431 = vmatpush.msra.mxu0 0.0
    %432 = vmatpush.msra.mxu0 0.0
    %433 = vmatpush.msra.mxu0 0.0
    %434 = vmatpush.msra.mxu0 0.0
    %435 = vmatpush.msra.mxu0 0.0
    %436 = vmatpush.msra.mxu0 0.0
    %437 = vmatpush.msra.mxu0 0.0
    %438 = vmatpush.msra.mxu0 %v367
    %439 = vmatpush.msra.mxu0 %v364
    %440 = vmatpush.msra.mxu0 %v361
    %441 = vmatpush.msra.mxu0 %v358
    %442 = vmatmul.f32.gmra.mxu0 %v424
    %v443 = vpop.f32.mrf.mxu0
    %v444 = vadd.f32 0.0, %v443
    %445 = vdwg.mxu0
    %v446 = vld [vmem:[%s18] sm:$0xff]
    %v447 = vld [vmem:[%s18 + $0x8] sm:$0xff]
    %v448 = vld [vmem:[%s18 + $0x10] sm:$0xff]
    %v449 = vld [vmem:[%s18 + $0x18] sm:$0xff]
    %v450 = vld [vmem:[%s19] sm:$0x1]
    %v452 = vperm.slane %v450, 0
    %v455 = vsel %vm80, %v396, 0
    %457 = vmatpush.msra.mxu0 0.0
    %458 = vmatpush.msra.mxu0 0.0
    %459 = vmatpush.msra.mxu0 0.0
    %460 = vmatpush.msra.mxu0 0.0
    %461 = vmatpush.msra.mxu0 0.0
    %462 = vmatpush.msra.mxu0 0.0
    %463 = vmatpush.msra.mxu0 0.0
    %464 = vmatpush.msra.mxu0 0.0
    %465 = vmatpush.msra.mxu0 0.0
    %466 = vmatpush.msra.mxu0 0.0
    %467 = vmatpush.msra.mxu0 0.0
    %468 = vmatpush.msra.mxu0 0.0
    %469 = vmatpush.msra.mxu0 %v449
    %470 = vmatpush.msra.mxu0 %v448
    %471 = vmatpush.msra.mxu0 %v447
    %472 = vmatpush.msra.mxu0 %v446
    %473 = vmatmul.f32.gmra.mxu0 %v455
    %v474 = vpop.f32.mrf.mxu0
    %v475 = vadd.f32 %v452, %v474
    %476 = vdwg.mxu0
    %v477 = vld [vmem:[%s20] sm:$0xff]
    %v478 = vld [vmem:[%s20 + $0x8] sm:$0xff]
    %v479 = vld [vmem:[%s20 + $0x10] sm:$0xff]
    %v480 = vld [vmem:[%s20 + $0x18] sm:$0xff]
    %v481 = vld [vmem:[%s21] sm:$0x1]
    %v483 = vperm.slane %v481, 0
    %v486 = vsel %vm80, %v420, 0
    %488 = vmatpush.msra.mxu0 0.0
    %489 = vmatpush.msra.mxu0 0.0
    %490 = vmatpush.msra.mxu0 0.0
    %491 = vmatpush.msra.mxu0 0.0
    %492 = vmatpush.msra.mxu0 0.0
    %493 = vmatpush.msra.mxu0 0.0
    %494 = vmatpush.msra.mxu0 0.0
    %495 = vmatpush.msra.mxu0 0.0
    %496 = vmatpush.msra.mxu0 0.0
    %497 = vmatpush.msra.mxu0 0.0
    %498 = vmatpush.msra.mxu0 0.0
    %499 = vmatpush.msra.mxu0 0.0
    %500 = vmatpush.msra.mxu0 %v480
    %501 = vmatpush.msra.mxu0 %v479
    %502 = vmatpush.msra.mxu0 %v478
    %503 = vmatpush.msra.mxu0 %v477
    %504 = vmatmul.f32.gmra.mxu0 %v486
    %v505 = vpop.f32.mrf.mxu0
    %v506 = vadd.f32 %v483, %v505
    %507 = vdwg.mxu0
    %v509 = vsel %vm80, %v444, 0
    %511 = vmatpush.msra.mxu0 0.0
    %512 = vmatpush.msra.mxu0 0.0
    %513 = vmatpush.msra.mxu0 0.0
    %514 = vmatpush.msra.mxu0 0.0
    %515 = vmatpush.msra.mxu0 0.0
    %516 = vmatpush.msra.mxu0 0.0
    %517 = vmatpush.msra.mxu0 0.0
    %518 = vmatpush.msra.mxu0 0.0
    %519 = vmatpush.msra.mxu0 0.0
    %520 = vmatpush.msra.mxu0 0.0
    %521 = vmatpush.msra.mxu0 0.0
    %522 = vmatpush.msra.mxu0 0.0
    %523 = vmatpush.msra.mxu0 %v480
    %524 = vmatpush.msra.mxu0 %v479
    %525 = vmatpush.msra.mxu0 %v478
    %526 = vmatpush.msra.mxu0 %v477
    %527 = vmatmul.f32.gmra.mxu0 %v509
    %v528 = vpop.f32.mrf.mxu0
    %v529 = vadd.f32 %v483, %v528
    %530 = vdwg.mxu0
    %v531 = vmul.f32 %v475, %v475
    %vm532 = vcmask 123904
    %v533 = vsel %vm532, %v531, 0.0
    %534 = vadd.xlane.f32.xlu0 %v533
    %v535 = vpop.xlane.xlu0 %534
    %v536 = vadd.f32 %v535, 1e-12
    %v537 = vrsqrt.pop %v536
    %v538 = vmul.f32 %v537, %v536
    %v539 = vmul.f32 %v538, %v537
    %v540 = vmul.f32 0.5, %v539
    %v541 = vsub.f32 1.5, %v540
    %v542 = vmul.f32 %v537, %v541
    %vm543 = vweird.f32 %v536
    %vm544 = vweird.f32 %v537
    %vm545 = vmor %vm543, %vm544
    %v546 = vsel %vm545, %v537, %v542
    %v547 = vmul.f32 %v475, %v546
    %v548 = vmul.f32 %v506, %v506
    %v549 = vsel %vm532, %v548, 0.0
    %550 = vadd.xlane.f32.xlu0 %v549
    %v551 = vpop.xlane.xlu0 %550
    %v552 = vadd.f32 %v551, 1e-12
    %v553 = vrsqrt.pop %v552
    %v554 = vmul.f32 %v553, %v552
    %v555 = vmul.f32 %v554, %v553
    %v556 = vmul.f32 0.5, %v555
    %v557 = vsub.f32 1.5, %v556
    %v558 = vmul.f32 %v553, %v557
    %vm559 = vweird.f32 %v552
    %vm560 = vweird.f32 %v553
    %vm561 = vmor %vm559, %vm560
    %v562 = vsel %vm561, %v553, %v558
    %v563 = vmul.f32 %v506, %v562
    %v564 = vmul.f32 %v529, %v529
    %v565 = vsel %vm532, %v564, 0.0
    %566 = vadd.xlane.f32.xlu0 %v565
    %v567 = vpop.xlane.xlu0 %566
    %v568 = vadd.f32 %v567, 1e-12
    %v569 = vrsqrt.pop %v568
    %v570 = vmul.f32 %v569, %v568
    %v571 = vmul.f32 %v570, %v569
    %v572 = vmul.f32 0.5, %v571
    %v573 = vsub.f32 1.5, %v572
    %v574 = vmul.f32 %v569, %v573
    %vm575 = vweird.f32 %v568
    %vm576 = vweird.f32 %v569
    %vm577 = vmor %vm575, %vm576
    %v578 = vsel %vm577, %v569, %v574
    %v579 = vmul.f32 %v529, %v578
    %v580 = vmul.f32 %v547, %v563
    %v581 = vsel %vm532, %v580, 0.0
    %582 = vadd.xlane.f32.xlu0 %v581
    %v583 = vpop.xlane.xlu0 %582
    %v584 = vmul.f32 %v547, %v579
    %v585 = vsel %vm532, %v584, 0.0
    %586 = vadd.xlane.f32.xlu0 %v585
    %v587 = vpop.xlane.xlu0 %586
    %v588 = vmul.f32 %v583, 1.442695
    %v589 = vpow.pop %v588
    %v590 = vadd.f32 %v589, 9.084302e-05
    %v591 = vlog2.pop %v590
    %v592 = vmul.f32 %v591, 0.6931472
    %v593 = vsub.f32 %v583, %v592
    %v594 = vmul.f32 %v587, 1.442695
    %v595 = vpow.pop %v594
    %v596 = vadd.f32 %v595, 9.084302e-05
    %v597 = vlog2.pop %v596
    %v598 = vmul.f32 %v597, 0.6931472
    %v599 = vsub.f32 -9.306377, %v598
    %vm600 = vcmask 1024
    %v601 = vsel %vm600, %v593, 0.0
    %602 = vadd.xlane.f32.xlu0 %v601
    %v603 = vpop.xlane.xlu0 %602
    %v604 = vrot.slane %v603, 4
    %v605 = vadd.f32 %v603, %v604
    %v606 = vrot.slane %v605, 2
    %v607 = vadd.f32 %v605, %v606
    %v608 = vrot.slane %v607, 1
    %v609 = vadd.f32 %v607, %v608
    %s610 = vtos %v609
    %v611 = vrcp.pop 2.0
    %v612 = vmul.f32 2.0, %v611
    %v613 = vsub.f32 1.0, %v612
    %v614 = vmul.f32 %v611, %v613
    %v615 = vadd.f32 %v611, %v614
    %vm616 = vweird.f32 %v611
    %v617 = vsel %vm616, %v611, %v615
    %s618 = vtos %v617
    %s619 = smul.f32 %s610, %s618
    %s620 = ssub.f32 0.0, %s619
    %v621 = vsel %vm600, %v599, 0.0
    %622 = vadd.xlane.f32.xlu0 %v621
    %v623 = vpop.xlane.xlu0 %622
    %v624 = vrot.slane %v623, 4
    %v625 = vadd.f32 %v623, %v624
    %v626 = vrot.slane %v625, 2
    %v627 = vadd.f32 %v625, %v626
    %v628 = vrot.slane %v627, 1
    %v629 = vadd.f32 %v627, %v628
    %s630 = vtos %v629
    %v631 = vrcp.pop 2.0
    %v632 = vmul.f32 2.0, %v631
    %v633 = vsub.f32 1.0, %v632
    %v634 = vmul.f32 %v631, %v633
    %v635 = vadd.f32 %v631, %v634
    %vm636 = vweird.f32 %v631
    %v637 = vsel %vm636, %v631, %v635
    %s638 = vtos %v637
    %s639 = smul.f32 %s630, %s638
    %s640 = ssub.f32 %s620, %s639
    %v641 = vstv %s640
    %vm642 = vcmask 0
    %643 = vst.msk [vmem:[#allocation2] sm:$0x1] %vm642, %v641
    // Predicated region
    $region90: #{_fwd.1} parent=1 // pred_check
      _
    $region91: #{_fwd.1} parent=1 // pred_check_branch
      %645 = sbr.rel (0) target = $region93
    $region92: #{_fwd.1} parent=1 // pred_region
      %647 = vsyncadd [#allocation3], 0
      %s649 = sshll.u32 [#allocation2], 4
      %s650 = int_to_ptr.vmem [resolvable:$true] %s649
      %s651 = sshll.u32 %s22, 4
      %s652 = int_to_ptr.hbm [resolvable:$true] %s651
      %654 = dma.vmem_to_hbm [thread:$0]  %s650, 16, %s652, [#allocation3]
    $region93: #{_fwd.1} parent=1 // pred_fallthru
      _
    // Predicated region
    $region94: #{_fwd.1} parent=1 // pred_check
      _
    $region95: #{_fwd.1} parent=1 // pred_check_branch
      %656 = sbr.rel (0) target = $region97
    $region96: #{_fwd.1} parent=1 // pred_region
      %658 = vsyncadd [#allocation5], 0
      %s659 = sshll.u32 [#allocation4], 4
      %s660 = int_to_ptr.vmem [resolvable:$true] %s659
      %s661 = sshll.u32 %s23, 4
      %s662 = int_to_ptr.hbm [resolvable:$true] %s661
      %667 = dma.vmem_to_hbm [thread:$0]  %s660, 256, %s662, [#allocation5], 128, 128, 8
    $region97: #{_fwd.1} parent=1 // pred_fallthru
      _
    // Predicated region
    $region98: #{_fwd.1} parent=1 // pred_check
      _
    $region99: #{_fwd.1} parent=1 // pred_check_branch
      %669 = sbr.rel (0) target = $region101
    $region100: #{_fwd.1} parent=1 // pred_region
      %671 = vsyncadd [#allocation5], 0
      %s673 = sshll.u32 [#allocation6], 4
      %s674 = int_to_ptr.vmem [resolvable:$true] %s673
      %s675 = sshll.u32 %s24, 4
      %s676 = int_to_ptr.hbm [resolvable:$true] %s675
      %678 = dma.vmem_to_hbm [thread:$0]  %s674, 128, %s676, [#allocation5]
    $region101: #{_fwd.1} parent=1 // pred_fallthru
      _
    // Predicated region
    $region102: #{_fwd.1} parent=1 // pred_check
      _
    $region103: #{_fwd.1} parent=1 // pred_check_branch
      %680 = sbr.rel (0) target = $region105
    $region104: #{_fwd.1} parent=1 // pred_region
      %682 = dma.done [#allocation3], 16
    $region105: #{_fwd.1} parent=1 // pred_fallthru
      _
    // Predicated region
    $region106: #{_fwd.1} parent=1 // pred_check
      _
    $region107: #{_fwd.1} parent=1 // pred_check_branch
      %684 = sbr.rel (0) target = $region109
    $region108: #{_fwd.1} parent=1 // pred_region
      %686 = dma.done [#allocation5], 256
    $region109: #{_fwd.1} parent=1 // pred_fallthru
      _
    // Predicated region
    $region110: #{_fwd.1} parent=1 // pred_check
      _
    $region111: #{_fwd.1} parent=1 // pred_check_branch
      %688 = sbr.rel (0) target = $region113
    $region112: #{_fwd.1} parent=1 // pred_region
      %690 = dma.done [#allocation5], 128
    $region113: #{_fwd.1} parent=1 // pred_fallthru
      _
    %691 = vsyncpa [#allocation3], 1
    %692 = vsyncpa [#allocation5], 1

</llo_original>
